<compile_context>
chip_gen: v7x
topology: tpu7x:2x2x1
jax: 0.10.0
libtpu: 0.0.40
codegen_flags: <defaults>
</compile_context>

<pallas_src>
import functools

import jax
import jax.numpy as jnp
from jax.experimental import pallas as pl
from jax.experimental.pallas import tpu as pltpu


def _elu(x):
    # ELU(alpha=1): x if x > 0 else exp(x) - 1 ; exp arg clamped for safety.
    return jnp.where(x > 0, x, jnp.exp(jnp.minimum(x, 0.0)) - 1.0)


def _gat_fused_kernel(x_ref, adj_ref, w_hid_ref, a_bd_ref, w_out_ref,
                      a_out_ref, out_ref, *, alpha, nheads, nhid, nclass):
    """Whole GAT forward on a small dense graph held in VMEM.

    x_ref:     (N, Fin)   f32   node features
    adj_ref:   (N, N)     bf16  adjacency (>0 means edge)
    w_hid_ref: (Fin, H*F) bf16  stacked per-head weight matrices
    a_bd_ref:  (H*F, 2H)  f32   block-diag attention vectors
                                cols [0,H)   = a[:F] per head
                                cols [H,2H)  = a[F:] per head
    w_out_ref: (H*F, C)   bf16  output-layer weights
    a_out_ref: (2, C)     f32   output-layer attention vector halves
    out_ref:   (N, 128)   f32   lane-dense slab; log-probs in lanes [0, C)
    """
    f32 = jnp.float32
    bf16 = jnp.bfloat16
    neg = f32(-9.0e15)
    n = out_ref.shape[0]

    adj_mask = adj_ref[...] > 0                               # (N, N) bool
    h = x_ref[...]                                            # (N, Fin) f32

    # ---- hidden layer: all heads fused -------------------------------------
    # (N, Fin) @ (Fin, H*F): bf16 operands, f32 accumulate (single MXU matmul).
    wh_all = jnp.dot(h.astype(bf16), w_hid_ref[...],
                     preferred_element_type=f32)              # (N, H*F)

    # Per-head Wh @ a halves via one matmul against the block-diag a-matrix
    # (kept f32: tiny, and preserves attention-logit precision on v5e too).
    wh12 = jnp.dot(wh_all, a_bd_ref[...],
                   preferred_element_type=f32)                # (N, 2H)
    wh12_t = wh12.T                                           # (2H, N) — one transpose
    wh1_t = wh12_t[:nheads]                                   # (H, N)
    wh2_t = wh12_t[nheads:]                                   # (H, N)

    # Batched attention for all heads at once.
    e = wh1_t[:, :, None] + wh2_t[:, None, :]                 # (H, N, N)
    e = jnp.where(e > 0, e, alpha * e)                        # LeakyReLU
    e = jnp.where(adj_mask[None, :, :], e, neg)               # mask non-edges
    e = jnp.exp(e - jnp.max(e, axis=-1, keepdims=True))       # softmax numer.
    inv_den = pl.reciprocal(jnp.sum(e, axis=-1, keepdims=True),
                            approx=True)                      # (H, N, 1) EUP

    # exp_att @ Wh per head (MXU, bf16 operands), normalize AFTER the matmul,
    # ELU, and keep the head slab in vregs (single concatenate, no scratch).
    heads = []
    for hd in range(nheads):                                  # static, tiny
        lo = hd * nhid
        wh_h = wh_all[:, lo:lo + nhid]                        # (N, F) lane slice
        y = jnp.dot(e[hd].astype(bf16), wh_h.astype(bf16),
                    preferred_element_type=f32)               # (N, F)
        heads.append(_elu(y * inv_den[hd]))                   # concat=True head
    hidden = jnp.concatenate(heads, axis=-1)                  # (N, H*F)

    # ---- output attention layer (concat=False) ------------------------------
    wh_o = jnp.dot(hidden.astype(bf16), w_out_ref[...],
                   preferred_element_type=f32)                # (N, C)
    a_out = a_out_ref[...]                                    # (2, C) f32
    wh1_o = jnp.sum(wh_o * a_out[0:1, :], axis=-1, keepdims=True)   # (N, 1) VPU
    wh2_o = jnp.sum(wh_o * a_out[1:2, :], axis=-1, keepdims=True)   # (N, 1)
    e_o = wh1_o + wh2_o.T                                     # (N, N)
    e_o = jnp.where(e_o > 0, e_o, alpha * e_o)
    e_o = jnp.where(adj_mask, e_o, neg)
    e_o = jnp.exp(e_o - jnp.max(e_o, axis=-1, keepdims=True))
    inv_den_o = pl.reciprocal(jnp.sum(e_o, axis=-1, keepdims=True),
                              approx=True)                    # (N, 1)
    y_o = jnp.dot(e_o.astype(bf16), wh_o.astype(bf16),
                  preferred_element_type=f32) * inv_den_o     # (N, C)

    # GAT.forward tail: F.elu(out_att(...)) then exact log_softmax(dim=1).
    hp = _elu(y_o)
    m = jnp.max(hp, axis=-1, keepdims=True)
    lse = m + jnp.log(jnp.sum(jnp.exp(hp - m), axis=-1, keepdims=True))
    logp = hp - lse                                           # (N, C)

    # Lane-dense store: pad classes to the full 128-lane output slab.
    pad = out_ref.shape[1] - nclass
    out_ref[...] = jnp.concatenate(
        [logp, jnp.zeros((n, pad), f32)], axis=-1).astype(out_ref.dtype)


def gat_forward(params, x, adj, *, alpha):
    """Fused GAT forward (inference: dropout is identity)."""
    # MXU-operand parameters cast to bf16 once at the boundary (f32 accum in
    # kernel); attention vectors stay f32.
    W_hid = params["W_hid"].astype(jnp.bfloat16)    # (Fin, H*F)
    A_bd = params["A_bd"]                           # (H*F, 2H) f32
    W_out = params["W_out"].astype(jnp.bfloat16)    # (H*F, C)
    A_out = params["A_out"]                         # (2, C) f32
    nheads = params["nheads"]
    nhid = params["nhid"]

    N, nfeat = x.shape
    nh_total = W_hid.shape[1]
    nclass = W_out.shape[1]
    c_pad = 128                                      # lane-dense output width

    adj_b = adj.astype(jnp.bfloat16)                 # only feeds a ">0" compare

    kernel = functools.partial(_gat_fused_kernel, alpha=alpha,
                               nheads=nheads, nhid=nhid, nclass=nclass)

    # VMEM budget derived from the actual working set (x2 in/out for double
    # buffering + batched attention temporaries), capped below v7x's 64 MiB.
    in_out_bytes = (x.size * 4 + adj_b.size * 2 + W_hid.size * 2 +
                    A_bd.size * 4 + W_out.size * 2 + A_out.size * 4 +
                    N * c_pad * 4)
    interm_bytes = (nheads * N * N * 4 * 3     # batched e / mask / exp temps
                    + N * N * 4 * 3            # output-layer attention temps
                    + N * nh_total * 4 * 4)    # wh_all / hidden temps
    vmem_limit = int(min(max(2 * in_out_bytes + interm_bytes + (1 << 20),
                             4 << 20), 48 << 20))

    out_padded = pl.pallas_call(
        kernel,
        out_shape=jax.ShapeDtypeStruct((N, c_pad), jnp.float32),
        grid=(1,),
        in_specs=[
            pl.BlockSpec((N, nfeat), lambda i: (0, 0)),
            pl.BlockSpec((N, N), lambda i: (0, 0)),
            pl.BlockSpec((nfeat, nh_total), lambda i: (0, 0)),
            pl.BlockSpec((nh_total, 2 * nheads), lambda i: (0, 0)),
            pl.BlockSpec((nh_total, nclass), lambda i: (0, 0)),
            pl.BlockSpec((2, nclass), lambda i: (0, 0)),
        ],
        out_specs=pl.BlockSpec((N, c_pad), lambda i: (0, 0)),
        compiler_params=pltpu.CompilerParams(
            dimension_semantics=("arbitrary",),
            vmem_limit_bytes=vmem_limit),
    )(x, adj_b, W_hid, A_bd, W_out, A_out)

    return out_padded[:, :nclass]


def xavier_uniform(key, shape, gain):
    fan_in, fan_out = shape[0], shape[1]
    bound = gain * jnp.sqrt(6.0 / (fan_in + fan_out))
    return jax.random.uniform(key, shape, jnp.float32, -bound, bound)


def init_gat_params(key, nfeat, nhid, nclass, nheads):
    """Per-head xavier init (matching the torch module), packed for the fused
    kernel: W stacked along the output axis; the per-head `a` vectors packed
    into one block-diagonal (H*nhid, 2H) matrix (first-half columns = a[:F],
    second-half columns = a[F:])."""
    gain = 1.414
    keys = jax.random.split(key, 2 * nheads + 2)

    Ws = []
    A_bd = jnp.zeros((nheads * nhid, 2 * nheads), jnp.float32)
    for i in range(nheads):
        W = xavier_uniform(keys[2 * i], (nfeat, nhid), gain)       # (Fin, F)
        a = xavier_uniform(keys[2 * i + 1], (2 * nhid, 1), gain)   # (2F, 1)
        Ws.append(W)
        A_bd = A_bd.at[i * nhid:(i + 1) * nhid, i].set(a[:nhid, 0])
        A_bd = A_bd.at[i * nhid:(i + 1) * nhid, nheads + i].set(a[nhid:, 0])
    W_hid = jnp.concatenate(Ws, axis=1)                            # (Fin, H*F)

    W_out = xavier_uniform(keys[-2], (nhid * nheads, nclass), gain)
    a_out = xavier_uniform(keys[-1], (2 * nclass, 1), gain)
    A_out = jnp.stack([a_out[:nclass, 0], a_out[nclass:, 0]])      # (2, C)

    return {"W_hid": W_hid, "A_bd": A_bd, "W_out": W_out, "A_out": A_out,
            "nheads": nheads, "nhid": nhid}


def gat_reference(params, x, adj, *, alpha):
    """Pure-JAX reference matching the torch module (inference)."""
    nheads, nhid = params["nheads"], params["nhid"]
    W_hid, A_bd = params["W_hid"], params["A_bd"]
    W_out, A_out = params["W_out"], params["A_out"]
    neg = -9.0e15

    def layer(h, W, a1, a2, concat):
        Wh = h @ W
        e = Wh @ a1[:, None] + (Wh @ a2[:, None]).T
        e = jnp.where(e > 0, e, alpha * e)
        att = jnp.where(adj > 0, e, neg)
        att = jax.nn.softmax(att, axis=1)
        hp = att @ Wh
        return jax.nn.elu(hp) if concat else hp

    outs = []
    for i in range(nheads):
        W = W_hid[:, i * nhid:(i + 1) * nhid]
        a1 = A_bd[i * nhid:(i + 1) * nhid, i]
        a2 = A_bd[i * nhid:(i + 1) * nhid, nheads + i]
        outs.append(layer(x, W, a1, a2, True))
    hcat = jnp.concatenate(outs, axis=-1)
    out = jax.nn.elu(layer(hcat, W_out, A_out[0], A_out[1], False))
    return jax.nn.log_softmax(out, axis=1)


if __name__ == "__main__":
    # small synthetic graph
    N = 16          # nodes
    nfeat = 8
    nhid = 8
    nclass = 4
    nheads = 4
    alpha = 0.2
    # dropout = 0.6 -> identity at inference

    root = jax.random.PRNGKey(0)
    k_x, k_adj, k_p = jax.random.split(root, 3)

    x = jax.random.normal(k_x, (N, nfeat), jnp.float32)
    # random sparse-ish adjacency with self-loops
    adj = (jax.random.uniform(k_adj, (N, N)) > 0.6).astype(jnp.float32)
    adj = jnp.maximum(adj, jnp.eye(N, dtype=jnp.float32))

    params = init_gat_params(k_p, nfeat, nhid, nclass, nheads)

    out = gat_forward(params, x, adj, alpha=alpha)
    out = jax.block_until_ready(out)

    assert out.shape == (N, nclass)
    assert bool(jnp.all(jnp.isfinite(out)))
    # rows of log_softmax must sum (in prob space) to ~1
    assert bool(jnp.allclose(jnp.sum(jnp.exp(out), axis=1), 1.0, atol=1e-4))
    # matches the dense reference (bf16 MXU operands + approx reciprocal
    # introduce ~1e-2-level differences at most on these shapes)
    ref = gat_reference(params, x, adj, alpha=alpha)
    assert bool(jnp.allclose(out, ref, atol=1e-1))

    print("KERNEL_OK")
</pallas_src>

<mosaic_0001>
module attributes {stable_mosaic.version = 11 : i64} {
  func.func @_gat_fused_kernel(%arg0: i32, %arg1: memref<16x8xf32, #tpu.memory_space<vmem>>, %arg2: memref<16x16xbf16, #tpu.memory_space<vmem>>, %arg3: memref<8x32xbf16, #tpu.memory_space<vmem>>, %arg4: memref<32x8xf32, #tpu.memory_space<vmem>>, %arg5: memref<32x4xbf16, #tpu.memory_space<vmem>>, %arg6: memref<2x4xf32, #tpu.memory_space<vmem>>, %arg7: memref<16x128xf32, #tpu.memory_space<vmem>>) attributes {dimension_semantics = [#tpu.dimension_semantics<arbitrary>], iteration_bounds = array<i64: 1>, scalar_prefetch = 0 : i64, scratch_operands = 0 : i64, tpu.core_type = #tpu.core_type<tc>, window_params = [{pipeline_mode = #tpu.pipeline_mode<synchronous>, transform_indices = @transform_0, window_bounds = array<i64: 16, 8>}, {pipeline_mode = #tpu.pipeline_mode<synchronous>, transform_indices = @transform_1, window_bounds = array<i64: 16, 16>}, {pipeline_mode = #tpu.pipeline_mode<synchronous>, transform_indices = @transform_2, window_bounds = array<i64: 8, 32>}, {pipeline_mode = #tpu.pipeline_mode<synchronous>, transform_indices = @transform_3, window_bounds = array<i64: 32, 8>}, {pipeline_mode = #tpu.pipeline_mode<synchronous>, transform_indices = @transform_4, window_bounds = array<i64: 32, 4>}, {pipeline_mode = #tpu.pipeline_mode<synchronous>, transform_indices = @transform_5, window_bounds = array<i64: 2, 4>}, {pipeline_mode = #tpu.pipeline_mode<synchronous>, transform_indices = @transform_6, window_bounds = array<i64: 16, 128>}]} {
    %c0 = arith.constant 0 : index
    %c0_0 = arith.constant 0 : index
    %0 = vector.load %arg2[%c0, %c0_0] : memref<16x16xbf16, #tpu.memory_space<vmem>>, vector<16x16xbf16>
    %cst = arith.constant 0.000000e+00 : bf16
    %1 = vector.broadcast %cst : bf16 to vector<16x16xbf16>
    %2 = arith.cmpf ogt, %0, %1 : vector<16x16xbf16>
    %c0_1 = arith.constant 0 : index
    %c0_2 = arith.constant 0 : index
    %3 = vector.load %arg1[%c0_1, %c0_2] : memref<16x8xf32, #tpu.memory_space<vmem>>, vector<16x8xf32>
    %4 = arith.truncf %3 : vector<16x8xf32> to vector<16x8xbf16>
    %c0_3 = arith.constant 0 : index
    %c0_4 = arith.constant 0 : index
    %5 = vector.load %arg3[%c0_3, %c0_4] : memref<8x32xbf16, #tpu.memory_space<vmem>>, vector<8x32xbf16>
    %cst_5 = arith.constant dense<0.000000e+00> : vector<16x32xf32>
    %6 = tpu.matmul %4, %5, %cst_5 {dimension_numbers = #tpu.dot_dimension_numbers<[1], [0], [0], [1], [0, 0, 1, 1], [], []>} : vector<16x8xbf16>, vector<8x32xbf16>, vector<16x32xf32> -> vector<16x32xf32>
    %c0_6 = arith.constant 0 : index
    %c0_7 = arith.constant 0 : index
    %7 = vector.load %arg4[%c0_6, %c0_7] : memref<32x8xf32, #tpu.memory_space<vmem>>, vector<32x8xf32>
    %cst_8 = arith.constant dense<0.000000e+00> : vector<16x8xf32>
    %8 = tpu.matmul %6, %7, %cst_8 {dimension_numbers = #tpu.dot_dimension_numbers<[1], [0], [0], [1], [0, 0, 1, 1], [], []>} : vector<16x32xf32>, vector<32x8xf32>, vector<16x8xf32> -> vector<16x8xf32>
    %9 = tpu.transpose %8, [1, 0] : vector<16x8xf32> -> vector<8x16xf32>
    %10 = vector.extract_strided_slice %9 {offsets = [0, 0], sizes = [4, 16], strides = [1, 1]} : vector<8x16xf32> to vector<4x16xf32>
    %11 = vector.extract_strided_slice %9 {offsets = [4, 0], sizes = [4, 16], strides = [1, 1]} : vector<8x16xf32> to vector<4x16xf32>
    %12 = vector.shape_cast %10 : vector<4x16xf32> to vector<4x16x1xf32>
    %13 = vector.shape_cast %11 : vector<4x16xf32> to vector<4x1x16xf32>
    %14 = vector.broadcast %12 : vector<4x16x1xf32> to vector<4x16x16xf32>
    %15 = vector.broadcast %13 : vector<4x1x16xf32> to vector<4x16x16xf32>
    %16 = arith.addf %14, %15 : vector<4x16x16xf32>
    %cst_9 = arith.constant 0.000000e+00 : f32
    %17 = vector.broadcast %cst_9 : f32 to vector<4x16x16xf32>
    %18 = arith.cmpf ogt, %16, %17 : vector<4x16x16xf32>
    %cst_10 = arith.constant 2.000000e-01 : f32
    %19 = vector.broadcast %cst_10 : f32 to vector<4x16x16xf32>
    %20 = arith.mulf %19, %16 : vector<4x16x16xf32>
    %21 = arith.select %18, %16, %20 : vector<4x16x16xi1>, vector<4x16x16xf32>
    %22 = vector.shape_cast %2 : vector<16x16xi1> to vector<1x16x16xi1>
    %cst_11 = arith.constant -9.000000e+15 : f32
    %23 = vector.shape_cast %22 : vector<1x16x16xi1> to vector<1x16x16xi1>
    %24 = vector.broadcast %23 : vector<1x16x16xi1> to vector<4x16x16xi1>
    %25 = vector.broadcast %cst_11 : f32 to vector<4x16x16xf32>
    %26 = arith.select %24, %21, %25 : vector<4x16x16xi1>, vector<4x16x16xf32>
    %cst_12 = arith.constant dense<0xFF800000> : vector<4x16xf32>
    %27 = vector.multi_reduction <maximumf>, %26, %cst_12 [2] : vector<4x16x16xf32> to vector<4x16xf32>
    %28 = vector.shape_cast %27 : vector<4x16xf32> to vector<4x16x1xf32>
    %29 = vector.broadcast %28 : vector<4x16x1xf32> to vector<4x16x16xf32>
    %30 = arith.subf %26, %29 : vector<4x16x16xf32>
    %31 = math.exp %30 : vector<4x16x16xf32>
    %cst_13 = arith.constant dense<0.000000e+00> : vector<4x16xf32>
    %32 = vector.multi_reduction <add>, %31, %cst_13 [2] : vector<4x16x16xf32> to vector<4x16xf32>
    %33 = vector.shape_cast %32 : vector<4x16xf32> to vector<4x16x1xf32>
    %34 = tpu.reciprocal %33 {approx = true} : vector<4x16x1xf32> -> vector<4x16x1xf32>
    %35 = vector.extract_strided_slice %6 {offsets = [0, 0], sizes = [16, 8], strides = [1, 1]} : vector<16x32xf32> to vector<16x8xf32>
    %36 = vector.extract_strided_slice %31 {offsets = [0, 0, 0], sizes = [1, 16, 16], strides = [1, 1, 1]} : vector<4x16x16xf32> to vector<1x16x16xf32>
    %37 = vector.shape_cast %36 : vector<1x16x16xf32> to vector<16x16xf32>
    %38 = arith.truncf %37 : vector<16x16xf32> to vector<16x16xbf16>
    %39 = arith.truncf %35 : vector<16x8xf32> to vector<16x8xbf16>
    %cst_14 = arith.constant dense<0.000000e+00> : vector<16x8xf32>
    %40 = tpu.matmul %38, %39, %cst_14 {dimension_numbers = #tpu.dot_dimension_numbers<[1], [0], [0], [1], [0, 0, 1, 1], [], []>} : vector<16x16xbf16>, vector<16x8xbf16>, vector<16x8xf32> -> vector<16x8xf32>
    %41 = vector.extract_strided_slice %34 {offsets = [0, 0, 0], sizes = [1, 16, 1], strides = [1, 1, 1]} : vector<4x16x1xf32> to vector<1x16x1xf32>
    %42 = vector.shape_cast %41 : vector<1x16x1xf32> to vector<16x1xf32>
    %43 = vector.broadcast %42 : vector<16x1xf32> to vector<16x8xf32>
    %44 = arith.mulf %40, %43 : vector<16x8xf32>
    %cst_15 = arith.constant 0.000000e+00 : f32
    %45 = vector.broadcast %cst_15 : f32 to vector<16x8xf32>
    %46 = arith.cmpf ogt, %44, %45 : vector<16x8xf32>
    %cst_16 = arith.constant 0.000000e+00 : f32
    %47 = vector.broadcast %cst_16 : f32 to vector<16x8xf32>
    %48 = arith.minimumf %44, %47 : vector<16x8xf32>
    %49 = math.exp %48 : vector<16x8xf32>
    %cst_17 = arith.constant 1.000000e+00 : f32
    %50 = vector.broadcast %cst_17 : f32 to vector<16x8xf32>
    %51 = arith.subf %49, %50 : vector<16x8xf32>
    %52 = arith.select %46, %44, %51 : vector<16x8xi1>, vector<16x8xf32>
    %53 = vector.extract_strided_slice %6 {offsets = [0, 8], sizes = [16, 8], strides = [1, 1]} : vector<16x32xf32> to vector<16x8xf32>
    %54 = vector.extract_strided_slice %31 {offsets = [1, 0, 0], sizes = [1, 16, 16], strides = [1, 1, 1]} : vector<4x16x16xf32> to vector<1x16x16xf32>
    %55 = vector.shape_cast %54 : vector<1x16x16xf32> to vector<16x16xf32>
    %56 = arith.truncf %55 : vector<16x16xf32> to vector<16x16xbf16>
    %57 = arith.truncf %53 : vector<16x8xf32> to vector<16x8xbf16>
    %cst_18 = arith.constant dense<0.000000e+00> : vector<16x8xf32>
    %58 = tpu.matmul %56, %57, %cst_18 {dimension_numbers = #tpu.dot_dimension_numbers<[1], [0], [0], [1], [0, 0, 1, 1], [], []>} : vector<16x16xbf16>, vector<16x8xbf16>, vector<16x8xf32> -> vector<16x8xf32>
    %59 = vector.extract_strided_slice %34 {offsets = [1, 0, 0], sizes = [1, 16, 1], strides = [1, 1, 1]} : vector<4x16x1xf32> to vector<1x16x1xf32>
    %60 = vector.shape_cast %59 : vector<1x16x1xf32> to vector<16x1xf32>
    %61 = vector.broadcast %60 : vector<16x1xf32> to vector<16x8xf32>
    %62 = arith.mulf %58, %61 : vector<16x8xf32>
    %cst_19 = arith.constant 0.000000e+00 : f32
    %63 = vector.broadcast %cst_19 : f32 to vector<16x8xf32>
    %64 = arith.cmpf ogt, %62, %63 : vector<16x8xf32>
    %cst_20 = arith.constant 0.000000e+00 : f32
    %65 = vector.broadcast %cst_20 : f32 to vector<16x8xf32>
    %66 = arith.minimumf %62, %65 : vector<16x8xf32>
    %67 = math.exp %66 : vector<16x8xf32>
    %cst_21 = arith.constant 1.000000e+00 : f32
    %68 = vector.broadcast %cst_21 : f32 to vector<16x8xf32>
    %69 = arith.subf %67, %68 : vector<16x8xf32>
    %70 = arith.select %64, %62, %69 : vector<16x8xi1>, vector<16x8xf32>
    %71 = vector.extract_strided_slice %6 {offsets = [0, 16], sizes = [16, 8], strides = [1, 1]} : vector<16x32xf32> to vector<16x8xf32>
    %72 = vector.extract_strided_slice %31 {offsets = [2, 0, 0], sizes = [1, 16, 16], strides = [1, 1, 1]} : vector<4x16x16xf32> to vector<1x16x16xf32>
    %73 = vector.shape_cast %72 : vector<1x16x16xf32> to vector<16x16xf32>
    %74 = arith.truncf %73 : vector<16x16xf32> to vector<16x16xbf16>
    %75 = arith.truncf %71 : vector<16x8xf32> to vector<16x8xbf16>
    %cst_22 = arith.constant dense<0.000000e+00> : vector<16x8xf32>
    %76 = tpu.matmul %74, %75, %cst_22 {dimension_numbers = #tpu.dot_dimension_numbers<[1], [0], [0], [1], [0, 0, 1, 1], [], []>} : vector<16x16xbf16>, vector<16x8xbf16>, vector<16x8xf32> -> vector<16x8xf32>
    %77 = vector.extract_strided_slice %34 {offsets = [2, 0, 0], sizes = [1, 16, 1], strides = [1, 1, 1]} : vector<4x16x1xf32> to vector<1x16x1xf32>
    %78 = vector.shape_cast %77 : vector<1x16x1xf32> to vector<16x1xf32>
    %79 = vector.broadcast %78 : vector<16x1xf32> to vector<16x8xf32>
    %80 = arith.mulf %76, %79 : vector<16x8xf32>
    %cst_23 = arith.constant 0.000000e+00 : f32
    %81 = vector.broadcast %cst_23 : f32 to vector<16x8xf32>
    %82 = arith.cmpf ogt, %80, %81 : vector<16x8xf32>
    %cst_24 = arith.constant 0.000000e+00 : f32
    %83 = vector.broadcast %cst_24 : f32 to vector<16x8xf32>
    %84 = arith.minimumf %80, %83 : vector<16x8xf32>
    %85 = math.exp %84 : vector<16x8xf32>
    %cst_25 = arith.constant 1.000000e+00 : f32
    %86 = vector.broadcast %cst_25 : f32 to vector<16x8xf32>
    %87 = arith.subf %85, %86 : vector<16x8xf32>
    %88 = arith.select %82, %80, %87 : vector<16x8xi1>, vector<16x8xf32>
    %89 = vector.extract_strided_slice %6 {offsets = [0, 24], sizes = [16, 8], strides = [1, 1]} : vector<16x32xf32> to vector<16x8xf32>
    %90 = vector.extract_strided_slice %31 {offsets = [3, 0, 0], sizes = [1, 16, 16], strides = [1, 1, 1]} : vector<4x16x16xf32> to vector<1x16x16xf32>
    %91 = vector.shape_cast %90 : vector<1x16x16xf32> to vector<16x16xf32>
    %92 = arith.truncf %91 : vector<16x16xf32> to vector<16x16xbf16>
    %93 = arith.truncf %89 : vector<16x8xf32> to vector<16x8xbf16>
    %cst_26 = arith.constant dense<0.000000e+00> : vector<16x8xf32>
    %94 = tpu.matmul %92, %93, %cst_26 {dimension_numbers = #tpu.dot_dimension_numbers<[1], [0], [0], [1], [0, 0, 1, 1], [], []>} : vector<16x16xbf16>, vector<16x8xbf16>, vector<16x8xf32> -> vector<16x8xf32>
    %95 = vector.extract_strided_slice %34 {offsets = [3, 0, 0], sizes = [1, 16, 1], strides = [1, 1, 1]} : vector<4x16x1xf32> to vector<1x16x1xf32>
    %96 = vector.shape_cast %95 : vector<1x16x1xf32> to vector<16x1xf32>
    %97 = vector.broadcast %96 : vector<16x1xf32> to vector<16x8xf32>
    %98 = arith.mulf %94, %97 : vector<16x8xf32>
    %cst_27 = arith.constant 0.000000e+00 : f32
    %99 = vector.broadcast %cst_27 : f32 to vector<16x8xf32>
    %100 = arith.cmpf ogt, %98, %99 : vector<16x8xf32>
    %cst_28 = arith.constant 0.000000e+00 : f32
    %101 = vector.broadcast %cst_28 : f32 to vector<16x8xf32>
    %102 = arith.minimumf %98, %101 : vector<16x8xf32>
    %103 = math.exp %102 : vector<16x8xf32>
    %cst_29 = arith.constant 1.000000e+00 : f32
    %104 = vector.broadcast %cst_29 : f32 to vector<16x8xf32>
    %105 = arith.subf %103, %104 : vector<16x8xf32>
    %106 = arith.select %100, %98, %105 : vector<16x8xi1>, vector<16x8xf32>
    %107 = tpu.concatenate %52, %70, %88, %106 in 1 : vector<16x8xf32>, vector<16x8xf32>, vector<16x8xf32>, vector<16x8xf32> -> vector<16x32xf32>
    %108 = arith.truncf %107 : vector<16x32xf32> to vector<16x32xbf16>
    %c0_30 = arith.constant 0 : index
    %c0_31 = arith.constant 0 : index
    %109 = vector.load %arg5[%c0_30, %c0_31] : memref<32x4xbf16, #tpu.memory_space<vmem>>, vector<32x4xbf16>
    %cst_32 = arith.constant dense<0.000000e+00> : vector<16x4xf32>
    %110 = tpu.matmul %108, %109, %cst_32 {dimension_numbers = #tpu.dot_dimension_numbers<[1], [0], [0], [1], [0, 0, 1, 1], [], []>} : vector<16x32xbf16>, vector<32x4xbf16>, vector<16x4xf32> -> vector<16x4xf32>
    %c0_33 = arith.constant 0 : index
    %c0_34 = arith.constant 0 : index
    %111 = vector.load %arg6[%c0_33, %c0_34] : memref<2x4xf32, #tpu.memory_space<vmem>>, vector<2x4xf32>
    %112 = vector.extract_strided_slice %111 {offsets = [0, 0], sizes = [1, 4], strides = [1, 1]} : vector<2x4xf32> to vector<1x4xf32>
    %113 = vector.broadcast %112 : vector<1x4xf32> to vector<16x4xf32>
    %114 = arith.mulf %110, %113 : vector<16x4xf32>
    %cst_35 = arith.constant dense<0.000000e+00> : vector<16xf32>
    %115 = vector.multi_reduction <add>, %114, %cst_35 [1] : vector<16x4xf32> to vector<16xf32>
    %116 = vector.shape_cast %115 : vector<16xf32> to vector<16x1xf32>
    %117 = vector.extract_strided_slice %111 {offsets = [1, 0], sizes = [1, 4], strides = [1, 1]} : vector<2x4xf32> to vector<1x4xf32>
    %118 = vector.broadcast %117 : vector<1x4xf32> to vector<16x4xf32>
    %119 = arith.mulf %110, %118 : vector<16x4xf32>
    %cst_36 = arith.constant dense<0.000000e+00> : vector<16xf32>
    %120 = vector.multi_reduction <add>, %119, %cst_36 [1] : vector<16x4xf32> to vector<16xf32>
    %121 = vector.shape_cast %120 : vector<16xf32> to vector<16x1xf32>
    %122 = tpu.transpose %121, [1, 0] : vector<16x1xf32> -> vector<1x16xf32>
    %123 = vector.broadcast %116 : vector<16x1xf32> to vector<16x16xf32>
    %124 = vector.broadcast %122 : vector<1x16xf32> to vector<16x16xf32>
    %125 = arith.addf %123, %124 : vector<16x16xf32>
    %cst_37 = arith.constant 0.000000e+00 : f32
    %126 = vector.broadcast %cst_37 : f32 to vector<16x16xf32>
    %127 = arith.cmpf ogt, %125, %126 : vector<16x16xf32>
    %cst_38 = arith.constant 2.000000e-01 : f32
    %128 = vector.broadcast %cst_38 : f32 to vector<16x16xf32>
    %129 = arith.mulf %128, %125 : vector<16x16xf32>
    %130 = arith.select %127, %125, %129 : vector<16x16xi1>, vector<16x16xf32>
    %cst_39 = arith.constant -9.000000e+15 : f32
    %131 = vector.broadcast %cst_39 : f32 to vector<16x16xf32>
    %132 = arith.select %2, %130, %131 : vector<16x16xi1>, vector<16x16xf32>
    %cst_40 = arith.constant dense<0xFF800000> : vector<16xf32>
    %133 = vector.multi_reduction <maximumf>, %132, %cst_40 [1] : vector<16x16xf32> to vector<16xf32>
    %134 = vector.shape_cast %133 : vector<16xf32> to vector<16x1xf32>
    %135 = vector.broadcast %134 : vector<16x1xf32> to vector<16x16xf32>
    %136 = arith.subf %132, %135 : vector<16x16xf32>
    %137 = math.exp %136 : vector<16x16xf32>
    %cst_41 = arith.constant dense<0.000000e+00> : vector<16xf32>
    %138 = vector.multi_reduction <add>, %137, %cst_41 [1] : vector<16x16xf32> to vector<16xf32>
    %139 = vector.shape_cast %138 : vector<16xf32> to vector<16x1xf32>
    %140 = tpu.reciprocal %139 {approx = true} : vector<16x1xf32> -> vector<16x1xf32>
    %141 = arith.truncf %137 : vector<16x16xf32> to vector<16x16xbf16>
    %142 = arith.truncf %110 : vector<16x4xf32> to vector<16x4xbf16>
    %cst_42 = arith.constant dense<0.000000e+00> : vector<16x4xf32>
    %143 = tpu.matmul %141, %142, %cst_42 {dimension_numbers = #tpu.dot_dimension_numbers<[1], [0], [0], [1], [0, 0, 1, 1], [], []>} : vector<16x16xbf16>, vector<16x4xbf16>, vector<16x4xf32> -> vector<16x4xf32>
    %144 = vector.broadcast %140 : vector<16x1xf32> to vector<16x4xf32>
    %145 = arith.mulf %143, %144 : vector<16x4xf32>
    %cst_43 = arith.constant 0.000000e+00 : f32
    %146 = vector.broadcast %cst_43 : f32 to vector<16x4xf32>
    %147 = arith.cmpf ogt, %145, %146 : vector<16x4xf32>
    %cst_44 = arith.constant 0.000000e+00 : f32
    %148 = vector.broadcast %cst_44 : f32 to vector<16x4xf32>
    %149 = arith.minimumf %145, %148 : vector<16x4xf32>
    %150 = math.exp %149 : vector<16x4xf32>
    %cst_45 = arith.constant 1.000000e+00 : f32
    %151 = vector.broadcast %cst_45 : f32 to vector<16x4xf32>
    %152 = arith.subf %150, %151 : vector<16x4xf32>
    %153 = arith.select %147, %145, %152 : vector<16x4xi1>, vector<16x4xf32>
    %cst_46 = arith.constant dense<0xFF800000> : vector<16xf32>
    %154 = vector.multi_reduction <maximumf>, %153, %cst_46 [1] : vector<16x4xf32> to vector<16xf32>
    %155 = vector.shape_cast %154 : vector<16xf32> to vector<16x1xf32>
    %156 = vector.broadcast %155 : vector<16x1xf32> to vector<16x4xf32>
    %157 = arith.subf %153, %156 : vector<16x4xf32>
    %158 = math.exp %157 : vector<16x4xf32>
    %cst_47 = arith.constant dense<0.000000e+00> : vector<16xf32>
    %159 = vector.multi_reduction <add>, %158, %cst_47 [1] : vector<16x4xf32> to vector<16xf32>
    %160 = vector.shape_cast %159 : vector<16xf32> to vector<16x1xf32>
    %161 = math.log %160 : vector<16x1xf32>
    %162 = arith.addf %155, %161 : vector<16x1xf32>
    %163 = vector.broadcast %162 : vector<16x1xf32> to vector<16x4xf32>
    %164 = arith.subf %153, %163 : vector<16x4xf32>
    %cst_48 = arith.constant 0.000000e+00 : f32
    %165 = vector.broadcast %cst_48 : f32 to vector<16x124xf32>
    %166 = tpu.concatenate %164, %165 in 1 : vector<16x4xf32>, vector<16x124xf32> -> vector<16x128xf32>
    %c0_49 = arith.constant 0 : index
    %c0_50 = arith.constant 0 : index
    %167 = vector.load %arg7[%c0_49, %c0_50] : memref<16x128xf32, #tpu.memory_space<vmem>>, vector<16x128xf32>
    tpu.vector_store %arg7[%c0_49, %c0_50], %166 {strides = array<i32>} : memref<16x128xf32, #tpu.memory_space<vmem>>, vector<16x128xf32>,
    return
  }
  func.func @transform_0(%arg0: i32) -> (i32, i32) {
    %c0_i32 = arith.constant 0 : i32
    %c0_i32_0 = arith.constant 0 : i32
    %c0_i32_1 = arith.constant 0 : i32
    return %c0_i32, %c0_i32_0 : i32, i32
  }
  func.func @transform_1(%arg0: i32) -> (i32, i32) {
    %c0_i32 = arith.constant 0 : i32
    %c0_i32_0 = arith.constant 0 : i32
    %c0_i32_1 = arith.constant 0 : i32
    return %c0_i32, %c0_i32_0 : i32, i32
  }
  func.func @transform_2(%arg0: i32) -> (i32, i32) {
    %c0_i32 = arith.constant 0 : i32
    %c0_i32_0 = arith.constant 0 : i32
    %c0_i32_1 = arith.constant 0 : i32
    return %c0_i32, %c0_i32_0 : i32, i32
  }
  func.func @transform_3(%arg0: i32) -> (i32, i32) {
    %c0_i32 = arith.constant 0 : i32
    %c0_i32_0 = arith.constant 0 : i32
    %c0_i32_1 = arith.constant 0 : i32
    return %c0_i32, %c0_i32_0 : i32, i32
  }
  func.func @transform_4(%arg0: i32) -> (i32, i32) {
    %c0_i32 = arith.constant 0 : i32
    %c0_i32_0 = arith.constant 0 : i32
    %c0_i32_1 = arith.constant 0 : i32
    return %c0_i32, %c0_i32_0 : i32, i32
  }
  func.func @transform_5(%arg0: i32) -> (i32, i32) {
    %c0_i32 = arith.constant 0 : i32
    %c0_i32_0 = arith.constant 0 : i32
    %c0_i32_1 = arith.constant 0 : i32
    return %c0_i32, %c0_i32_0 : i32, i32
  }
  func.func @transform_6(%arg0: i32) -> (i32, i32) {
    %c0_i32 = arith.constant 0 : i32
    %c0_i32_0 = arith.constant 0 : i32
    %c0_i32_1 = arith.constant 0 : i32
    return %c0_i32, %c0_i32_0 : i32, i32
  }
}

</mosaic_0001>

<llo_original>
// kernel: tpu_custom_call.1
$region0: #{tpu_custom_call.1}
  #allocation0 [shape = 'u32[]', space=smem, size = 0x4, offset = 0x4, fixed_abs, tag = 'smem constant byte address 0x4 - core index']
  #allocation1 [shape = 'u32[144,128]{1,0:T(1,128)}', space=vmem, size = 0x12000, scoped, tag = 'internal scratch']
  %s0 = inlined_call_operand.vmem [shape: f32[16,8], index: 0, kind: input, shape index: {}]
  %s1 = inlined_call_operand.vmem [shape: bf16[16,16], index: 1, kind: input, shape index: {}]
  %s2 = inlined_call_operand.vmem [shape: bf16[8,32], index: 2, kind: input, shape index: {}]
  %s3 = inlined_call_operand.vmem [shape: f32[32,8], index: 3, kind: input, shape index: {}]
  %s4 = inlined_call_operand.vmem [shape: bf16[32,4], index: 4, kind: input, shape index: {}]
  %s5 = inlined_call_operand.vmem [shape: f32[2,4], index: 5, kind: input, shape index: {}]
  %s6 = inlined_call_operand.hbm [shape: f32[16,128], index: 6, kind: output, shape index: {}]
  %s7 = sld [smem:[#allocation0]]
  $region34: #{tpu_custom_call.1} parent=0
    _
  %s9 = ssub.s32 1, %s7
  %s10 = scalar_select 0, %s9, %s7
  $region1: #{tpu_custom_call.1} parent=0
    #allocation2 [shape = 'u8[8192]{0}', space=vmem, size = 0x2000, scoped, tag = 'output window, operand 0, single buffered']
    #allocation3 [shape = 's32[1]{0}', space=sflag, size = 0x4, scoped, tag = 'scoped memory for tpu_custom_call.1']
    %11 = vsyncpa [#allocation3], 0
    // Predicated region
    $region2: #{tpu_custom_call.1} parent=1 // pred_check
      _
    $region3: #{tpu_custom_call.1} parent=1 // pred_check_branch
      %13 = sbr.rel (0) target = $region5
    $region4: #{tpu_custom_call.1} parent=1 // pred_region
      _
    $region5: #{tpu_custom_call.1} parent=1 // pred_fallthru
      _
    // Predicated region
    $region6: #{tpu_custom_call.1} parent=1 // pred_check
      _
    $region7: #{tpu_custom_call.1} parent=1 // pred_check_branch
      %15 = sbr.rel (0) target = $region9
    $region8: #{tpu_custom_call.1} parent=1 // pred_region
      _
    $region9: #{tpu_custom_call.1} parent=1 // pred_fallthru
      _
    // Predicated region
    $region10: #{tpu_custom_call.1} parent=1 // pred_check
      _
    $region11: #{tpu_custom_call.1} parent=1 // pred_check_branch
      %17 = sbr.rel (0) target = $region13
    $region12: #{tpu_custom_call.1} parent=1 // pred_region
      _
    $region13: #{tpu_custom_call.1} parent=1 // pred_fallthru
      _
    // Predicated region
    $region14: #{tpu_custom_call.1} parent=1 // pred_check
      _
    $region15: #{tpu_custom_call.1} parent=1 // pred_check_branch
      %19 = sbr.rel (0) target = $region17
    $region16: #{tpu_custom_call.1} parent=1 // pred_region
      _
    $region17: #{tpu_custom_call.1} parent=1 // pred_fallthru
      _
    // Predicated region
    $region18: #{tpu_custom_call.1} parent=1 // pred_check
      _
    $region19: #{tpu_custom_call.1} parent=1 // pred_check_branch
      %21 = sbr.rel (0) target = $region21
    $region20: #{tpu_custom_call.1} parent=1 // pred_region
      _
    $region21: #{tpu_custom_call.1} parent=1 // pred_fallthru
      _
    // Predicated region
    $region22: #{tpu_custom_call.1} parent=1 // pred_check
      _
    $region23: #{tpu_custom_call.1} parent=1 // pred_check_branch
      %23 = sbr.rel (0) target = $region25
    $region24: #{tpu_custom_call.1} parent=1 // pred_region
      _
    $region25: #{tpu_custom_call.1} parent=1 // pred_fallthru
      _
    %v27 = vld [vmem:[%s1] sm:$0xf]
    %v28 = vld [vmem:[%s1 + $0x4] sm:$0xf]
    %vm29 = vcmp.gt.bf16.partialorder %v27, 0
    %vm30 = vcmp.gt.bf16.partialorder %v28, 0
    %v31 = vld [vmem:[%s0] sm:$0xff]
    %v32 = vld [vmem:[%s0 + $0x8] sm:$0xff]
    %v33 = vpack.c.bf16 %v32, %v31
    %v34 = vld [vmem:[%s2] sm:$0xf]
    %vm35 = vcmask 64512
    %v37 = vsel %vm35, %v33, 0
    %vm39 = vcmask 1043456
    %v41 = vsel %vm39, %v34, 0
    %43 = vmatprep.subr.bf16.mxu0 0
    %44 = vmatpush1.bf16.msra.mxu0 %v41
    %45 = vmatprep.subr.bf16.mxu0 0
    %46 = vmatpush1.bf16.msra.mxu0 0
    %47 = vmatprep.subr.bf16.mxu0 0
    %48 = vmatpush1.bf16.msra.mxu0 0
    %49 = vmatprep.subr.bf16.mxu0 0
    %50 = vmatpush1.bf16.msra.mxu0 0
    %51 = vmatprep.subr.bf16.mxu0 0
    %52 = vmatpush1.bf16.msra.mxu0 0
    %53 = vmatprep.subr.bf16.mxu0 0
    %54 = vmatpush1.bf16.msra.mxu0 0
    %55 = vmatprep.subr.bf16.mxu0 0
    %56 = vmatpush1.bf16.msra.mxu0 0
    %57 = vmatprep.subr.bf16.mxu0 0
    %58 = vmatpush1.bf16.msra.mxu0 0
    %59 = vmatprep.subr.bf16.mxu0 0
    %60 = vmatpush1.bf16.msra.mxu0 0
    %61 = vmatprep.subr.bf16.mxu0 0
    %62 = vmatpush1.bf16.msra.mxu0 0
    %63 = vmatprep.subr.bf16.mxu0 0
    %64 = vmatpush1.bf16.msra.mxu0 0
    %65 = vmatprep.subr.bf16.mxu0 0
    %66 = vmatpush1.bf16.msra.mxu0 0
    %67 = vmatprep.subr.bf16.mxu0 0
    %68 = vmatpush1.bf16.msra.mxu0 0
    %69 = vmatprep.subr.bf16.mxu0 0
    %70 = vmatpush1.bf16.msra.mxu0 0
    %71 = vmatprep.subr.bf16.mxu0 0
    %72 = vmatpush1.bf16.msra.mxu0 0
    %73 = vmatprep.subr.bf16.mxu0 0
    %74 = vmatpush1.bf16.msra.mxu0 0
    %75 = vmatprep.mubr.bf16.mxu0 0
    %76 = vmatmul.mubr.bf16.gmra.mrb[0].mxu0 %v37
    %v77 = vpop.f32.mrb[0].mxu0
    %v78 = vadd.f32 0.0, %v77
    %v79 = vpop.f32.mrb[0].mxu0
    %v80 = vpop.f32.mrb[0].mxu0
    %v81 = vadd.f32 0.0, %v80
    %v82 = vpop.f32.mrb[0].mxu0
    %83 = vdwg.mxu0
    %v84 = vld [vmem:[%s3] sm:$0xff]
    %v85 = vld [vmem:[%s3 + $0x8] sm:$0xff]
    %v86 = vld [vmem:[%s3 + $0x10] sm:$0xff]
    %v87 = vld [vmem:[%s3 + $0x18] sm:$0xff]
    %vm88 = vcmask 261120
    %v90 = vsel %vm88, %v78, 0
    %v93 = vsel %vm88, %v81, 0
    %95 = vmatprep.subr.mxu0 0.0
    %96 = vmatpush1.msra.mxu0 %v84
    %97 = vmatprep.subr.mxu0 0.0
    %98 = vmatpush1.msra.mxu0 %v85
    %99 = vmatprep.subr.mxu0 0.0
    %100 = vmatpush1.msra.mxu0 %v86
    %101 = vmatprep.subr.mxu0 0.0
    %102 = vmatpush1.msra.mxu0 %v87
    %103 = vmatprep.subr.mxu0 0.0
    %104 = vmatpush1.msra.mxu0 0.0
    %105 = vmatprep.subr.mxu0 0.0
    %106 = vmatpush1.msra.mxu0 0.0
    %107 = vmatprep.subr.mxu0 0.0
    %108 = vmatpush1.msra.mxu0 0.0
    %109 = vmatprep.subr.mxu0 0.0
    %110 = vmatpush1.msra.mxu0 0.0
    %111 = vmatprep.subr.mxu0 0.0
    %112 = vmatpush1.msra.mxu0 0.0
    %113 = vmatprep.subr.mxu0 0.0
    %114 = vmatpush1.msra.mxu0 0.0
    %115 = vmatprep.subr.mxu0 0.0
    %116 = vmatpush1.msra.mxu0 0.0
    %117 = vmatprep.subr.mxu0 0.0
    %118 = vmatpush1.msra.mxu0 0.0
    %119 = vmatprep.subr.mxu0 0.0
    %120 = vmatpush1.msra.mxu0 0.0
    %121 = vmatprep.subr.mxu0 0.0
    %122 = vmatpush1.msra.mxu0 0.0
    %123 = vmatprep.subr.mxu0 0.0
    %124 = vmatpush1.msra.mxu0 0.0
    %125 = vmatprep.subr.mxu0 0.0
    %126 = vmatpush1.msra.mxu0 0.0
    %127 = vmatprep.subr.mxu0 0.0
    %128 = vmatpush1.msra.mxu0 0.0
    %129 = vmatprep.subr.mxu0 0.0
    %130 = vmatpush1.msra.mxu0 0.0
    %131 = vmatprep.subr.mxu0 0.0
    %132 = vmatpush1.msra.mxu0 0.0
    %133 = vmatprep.subr.mxu0 0.0
    %134 = vmatpush1.msra.mxu0 0.0
    %135 = vmatprep.subr.mxu0 0.0
    %136 = vmatpush1.msra.mxu0 0.0
    %137 = vmatprep.subr.mxu0 0.0
    %138 = vmatpush1.msra.mxu0 0.0
    %139 = vmatprep.subr.mxu0 0.0
    %140 = vmatpush1.msra.mxu0 0.0
    %141 = vmatprep.subr.mxu0 0.0
    %142 = vmatpush1.msra.mxu0 0.0
    %143 = vmatprep.subr.mxu0 0.0
    %144 = vmatpush1.msra.mxu0 0.0
    %145 = vmatprep.subr.mxu0 0.0
    %146 = vmatpush1.msra.mxu0 0.0
    %147 = vmatprep.subr.mxu0 0.0
    %148 = vmatpush1.msra.mxu0 0.0
    %149 = vmatprep.subr.mxu0 0.0
    %150 = vmatpush1.msra.mxu0 0.0
    %151 = vmatprep.subr.mxu0 0.0
    %152 = vmatpush1.msra.mxu0 0.0
    %153 = vmatprep.subr.mxu0 0.0
    %154 = vmatpush1.msra.mxu0 0.0
    %155 = vmatprep.subr.mxu0 0.0
    %156 = vmatpush1.msra.mxu0 0.0
    %157 = vmatprep.subr.mxu0 0.0
    %158 = vmatpush1.msra.mxu0 0.0
    %159 = vmatprep.mubr.f32.mxu0 0.0
    %160 = vmatmul.mubr.f32.gmra.mrb[0].mxu0 %v90
    %v161 = vpop.f32.mrb[0].mxu0
    %v162 = vadd.f32 0.0, %v161
    %v163 = vpop.f32.mrb[0].mxu0
    %164 = vmatprep.mubr.f32.mxu0 0.0
    %165 = vmatmul.mubr.f32.gmra.mrb[0].mxu0 %v93
    %v166 = vpop.f32.mrb[0].mxu0
    %v167 = vadd.f32 0.0, %v166
    %v168 = vpop.f32.mrb[0].mxu0
    %169 = vdwg.mxu0
    %170 = vxpose.xlu0.b32.start [1/16] %v162, 128
    %171 = vxpose.xlu0.b32.cont [2/16] %v167, 128
    %172 = vxpose.xlu0.b32.cont [3/16] 0.0, 128
    %173 = vxpose.xlu0.b32.cont [4/16] 0.0, 128
    %174 = vxpose.xlu0.b32.cont [5/16] 0.0, 128
    %175 = vxpose.xlu0.b32.cont [6/16] 0.0, 128
    %176 = vxpose.xlu0.b32.cont [7/16] 0.0, 128
    %177 = vxpose.xlu0.b32.cont [8/16] 0.0, 128
    %178 = vxpose.xlu0.b32.cont [9/16] 0.0, 128
    %179 = vxpose.xlu0.b32.cont [10/16] 0.0, 128
    %180 = vxpose.xlu0.b32.cont [11/16] 0.0, 128
    %181 = vxpose.xlu0.b32.cont [12/16] 0.0, 128
    %182 = vxpose.xlu0.b32.cont [13/16] 0.0, 128
    %183 = vxpose.xlu0.b32.cont [14/16] 0.0, 128
    %184 = vxpose.xlu0.b32.cont [15/16] 0.0, 128
    %185 = vxpose.xlu0.b32.end [16/16] 0.0, 128
    %v186 = vpop.trf.xlu0
    %v187 = vpop.trf.xlu0
    %v188 = vpop.trf.xlu0
    %v189 = vpop.trf.xlu0
    %v190 = vpop.trf.xlu0
    %v191 = vpop.trf.xlu0
    %v192 = vpop.trf.xlu0
    %v193 = vpop.trf.xlu0
    %v194 = vpop.trf.xlu0
    %v195 = vpop.trf.xlu0
    %v196 = vpop.trf.xlu0
    %v197 = vpop.trf.xlu0
    %v198 = vpop.trf.xlu0
    %v199 = vpop.trf.xlu0
    %v200 = vpop.trf.xlu0
    %v201 = vpop.trf.xlu0
    %v202 = vlaneseq
    %v203 = vshrl.u32 %v202, 7
    %v204 = vsub.s32 0, %v203
    %v205 = vrot.slane %v186, %v204
    %207 = vbcast.lane.b32.xlu0 %v205, 256
    %v208 = vpop.permute.xlu0 %207
    %s210 = sor.u32 256, 8
    %211 = vbcast.lane.b32.xlu0 %v205, %s210
    %v212 = vpop.permute.xlu0 %211
    %v213 = vlaneseq
    %v214 = vshrl.u32 %v213, 7
    %v215 = vsub.s32 1, %v214
    %v216 = vrot.slane %v186, %v215
    %218 = vbcast.lane.b32.xlu0 %v216, 256
    %v219 = vpop.permute.xlu0 %218
    %s221 = sor.u32 256, 8
    %222 = vbcast.lane.b32.xlu0 %v216, %s221
    %v223 = vpop.permute.xlu0 %222
    %v224 = vlaneseq
    %v225 = vshrl.u32 %v224, 7
    %v226 = vsub.s32 2, %v225
    %v227 = vrot.slane %v186, %v226
    %229 = vbcast.lane.b32.xlu0 %v227, 256
    %v230 = vpop.permute.xlu0 %229
    %s232 = sor.u32 256, 8
    %233 = vbcast.lane.b32.xlu0 %v227, %s232
    %v234 = vpop.permute.xlu0 %233
    %v235 = vlaneseq
    %v236 = vshrl.u32 %v235, 7
    %v237 = vsub.s32 3, %v236
    %v238 = vrot.slane %v186, %v237
    %240 = vbcast.lane.b32.xlu0 %v238, 256
    %v241 = vpop.permute.xlu0 %240
    %s243 = sor.u32 256, 8
    %244 = vbcast.lane.b32.xlu0 %v238, %s243
    %v245 = vpop.permute.xlu0 %244
    %v247 = vcombine.high %v186, %v186
    %v249 = vunpack.c.l.s4 1966171168
    %v250 = vunpack.c.0.s8 %v249
    %v251 = vlaneseq
    %v252 = vshrl.u32 %v251, 7
    %v253 = vsub.s32 %v250, %v252
    %v254 = vrot.slane %v247, %v253
    %v255 = vcombine.high %v254, %v254
    %v257 = vunpack.c.l.s4 1966171168
    %v258 = vunpack.c.0.s8 %v257
    %v259 = vlaneseq
    %v260 = vshrl.u32 %v259, 7
    %v261 = vsub.s32 %v258, %v260
    %v262 = vrot.slane %v254, %v261
    %v264 = vunpack.c.l.s4 1966171168
    %v265 = vunpack.c.0.s8 %v264
    %v266 = vlaneseq
    %v267 = vshrl.u32 %v266, 7
    %v268 = vsub.s32 %v265, %v267
    %v269 = vrot.slane %v255, %v268
    %v270 = vcombine.high %v262, %v262
    %v271 = vcombine.high %v269, %v269
    %v272 = vlaneseq
    %v273 = vshrl.u32 %v272, 7
    %v274 = vsub.s32 0, %v273
    %v275 = vrot.slane %v262, %v274
    %v276 = vlaneseq
    %v277 = vshrl.u32 %v276, 7
    %v278 = vsub.s32 0, %v277
    %v279 = vrot.slane %v269, %v278
    %v280 = vlaneseq
    %v281 = vshrl.u32 %v280, 7
    %v282 = vsub.s32 0, %v281
    %v283 = vrot.slane %v270, %v282
    %v284 = vlaneseq
    %v285 = vshrl.u32 %v284, 7
    %v286 = vsub.s32 0, %v285
    %v287 = vrot.slane %v271, %v286
    %v292 = vadd.f32 %v208, %v275
    %v293 = vadd.f32 %v212, %v275
    %v294 = vadd.f32 %v219, %v279
    %v295 = vadd.f32 %v223, %v279
    %v296 = vadd.f32 %v230, %v283
    %v297 = vadd.f32 %v234, %v283
    %v298 = vadd.f32 %v241, %v287
    %v299 = vadd.f32 %v245, %v287
    %vm300 = vcmp.gt.f32.partialorder %v292, 0.0
    %vm301 = vcmp.gt.f32.partialorder %v293, 0.0
    %vm302 = vcmp.gt.f32.partialorder %v294, 0.0
    %vm303 = vcmp.gt.f32.partialorder %v295, 0.0
    %vm304 = vcmp.gt.f32.partialorder %v296, 0.0
    %vm305 = vcmp.gt.f32.partialorder %v297, 0.0
    %vm306 = vcmp.gt.f32.partialorder %v298, 0.0
    %vm307 = vcmp.gt.f32.partialorder %v299, 0.0
    %v308 = vmul.f32 %v292, 0.2
    %v309 = vmul.f32 %v293, 0.2
    %v310 = vmul.f32 %v294, 0.2
    %v311 = vmul.f32 %v295, 0.2
    %v312 = vmul.f32 %v296, 0.2
    %v313 = vmul.f32 %v297, 0.2
    %v314 = vmul.f32 %v298, 0.2
    %v315 = vmul.f32 %v299, 0.2
    %v316 = vsel %vm300, %v292, %v308
    %v317 = vsel %vm301, %v293, %v309
    %v318 = vsel %vm302, %v294, %v310
    %v319 = vsel %vm303, %v295, %v311
    %v320 = vsel %vm304, %v296, %v312
    %v321 = vsel %vm305, %v297, %v313
    %v322 = vsel %vm306, %v298, %v314
    %v323 = vsel %vm307, %v299, %v315
    %v324 = vsel %vm29, 65537, 0
    %v325 = vsel %vm30, 65537, 0
    %v326 = vunpack.c.l.b16 %v324
    %v327 = vunpack.c.l.b16 %v325
    %vm328 = vcmp.ne.s32.totalorder %v326, 0
    %vm329 = vcmp.ne.s32.totalorder %v327, 0
    %v330 = vsel %vm328, 1, 0
    %v331 = vsel %vm329, 1, 0
    %vm332 = vcmp.eq.s32.totalorder %v330, 1
    %vm333 = vcmp.eq.s32.totalorder %v331, 1
    %v334 = vsel %vm332, %v316, -9e+15
    %v335 = vsel %vm333, %v317, -9e+15
    %v336 = vsel %vm332, %v318, -9e+15
    %v337 = vsel %vm333, %v319, -9e+15
    %v338 = vsel %vm332, %v320, -9e+15
    %v339 = vsel %vm333, %v321, -9e+15
    %v340 = vsel %vm332, %v322, -9e+15
    %v341 = vsel %vm333, %v323, -9e+15
    %vm342 = vcmask 130048
    %v343 = vsel %vm342, %v334, -inf
    %344 = vmax.xlane.f32.xlu0 %v343
    %v345 = vpop.xlane.xlu0 %344
    %v346 = vsel %vm342, %v335, -inf
    %347 = vmax.xlane.f32.xlu0 %v346
    %v348 = vpop.xlane.xlu0 %347
    %v349 = vsel %vm342, %v336, -inf
    %350 = vmax.xlane.f32.xlu0 %v349
    %v351 = vpop.xlane.xlu0 %350
    %v352 = vsel %vm342, %v337, -inf
    %353 = vmax.xlane.f32.xlu0 %v352
    %v354 = vpop.xlane.xlu0 %353
    %v355 = vsel %vm342, %v338, -inf
    %356 = vmax.xlane.f32.xlu0 %v355
    %v357 = vpop.xlane.xlu0 %356
    %v358 = vsel %vm342, %v339, -inf
    %359 = vmax.xlane.f32.xlu0 %v358
    %v360 = vpop.xlane.xlu0 %359
    %v361 = vsel %vm342, %v340, -inf
    %362 = vmax.xlane.f32.xlu0 %v361
    %v363 = vpop.xlane.xlu0 %362
    %v364 = vsel %vm342, %v341, -inf
    %365 = vmax.xlane.f32.xlu0 %v364
    %v366 = vpop.xlane.xlu0 %365
    %v367 = vsub.f32 %v334, %v345
    %v368 = vsub.f32 %v335, %v348
    %v369 = vsub.f32 %v336, %v351
    %v370 = vsub.f32 %v337, %v354
    %v371 = vsub.f32 %v338, %v357
    %v372 = vsub.f32 %v339, %v360
    %v373 = vsub.f32 %v340, %v363
    %v374 = vsub.f32 %v341, %v366
    %v375 = vmul.f32 %v367, 1.442695
    %v376 = vpow.pop %v375
    %v377 = vmul.f32 %v368, 1.442695
    %v378 = vpow.pop %v377
    %v379 = vmul.f32 %v369, 1.442695
    %v380 = vpow.pop %v379
    %v381 = vmul.f32 %v370, 1.442695
    %v382 = vpow.pop %v381
    %v383 = vmul.f32 %v371, 1.442695
    %v384 = vpow.pop %v383
    %v385 = vmul.f32 %v372, 1.442695
    %v386 = vpow.pop %v385
    %v387 = vmul.f32 %v373, 1.442695
    %v388 = vpow.pop %v387
    %v389 = vmul.f32 %v374, 1.442695
    %v390 = vpow.pop %v389
    %v391 = vsel %vm342, %v376, 0.0
    %392 = vadd.xlane.f32.xlu0 %v391
    %v393 = vpop.xlane.xlu0 %392
    %v394 = vsel %vm342, %v378, 0.0
    %395 = vadd.xlane.f32.xlu0 %v394
    %v396 = vpop.xlane.xlu0 %395
    %v397 = vsel %vm342, %v380, 0.0
    %398 = vadd.xlane.f32.xlu0 %v397
    %v399 = vpop.xlane.xlu0 %398
    %v400 = vsel %vm342, %v382, 0.0
    %401 = vadd.xlane.f32.xlu0 %v400
    %v402 = vpop.xlane.xlu0 %401
    %v403 = vsel %vm342, %v384, 0.0
    %404 = vadd.xlane.f32.xlu0 %v403
    %v405 = vpop.xlane.xlu0 %404
    %v406 = vsel %vm342, %v386, 0.0
    %407 = vadd.xlane.f32.xlu0 %v406
    %v408 = vpop.xlane.xlu0 %407
    %v409 = vsel %vm342, %v388, 0.0
    %410 = vadd.xlane.f32.xlu0 %v409
    %v411 = vpop.xlane.xlu0 %410
    %v412 = vsel %vm342, %v390, 0.0
    %413 = vadd.xlane.f32.xlu0 %v412
    %v414 = vpop.xlane.xlu0 %413
    %v415 = vrcp.pop %v393
    %v416 = vrcp.pop %v396
    %v417 = vrcp.pop %v399
    %v418 = vrcp.pop %v402
    %v419 = vrcp.pop %v405
    %v420 = vrcp.pop %v408
    %v421 = vrcp.pop %v411
    %v422 = vrcp.pop %v414
    %v423 = vpack.c.bf16 %v378, %v376
    %v424 = vpack.c.bf16 %v81, %v78
    %v426 = vsel %vm342, %v423, 0
    %428 = vmatprep.subr.bf16.mxu0 0
    %429 = vmatpush1.bf16.msra.mxu0 %v424
    %430 = vmatprep.subr.bf16.mxu0 0
    %431 = vmatpush1.bf16.msra.mxu0 0
    %432 = vmatprep.subr.bf16.mxu0 0
    %433 = vmatpush1.bf16.msra.mxu0 0
    %434 = vmatprep.subr.bf16.mxu0 0
    %435 = vmatpush1.bf16.msra.mxu0 0
    %436 = vmatprep.subr.bf16.mxu0 0
    %437 = vmatpush1.bf16.msra.mxu0 0
    %438 = vmatprep.subr.bf16.mxu0 0
    %439 = vmatpush1.bf16.msra.mxu0 0
    %440 = vmatprep.subr.bf16.mxu0 0
    %441 = vmatpush1.bf16.msra.mxu0 0
    %442 = vmatprep.subr.bf16.mxu0 0
    %443 = vmatpush1.bf16.msra.mxu0 0
    %444 = vmatprep.subr.bf16.mxu0 0
    %445 = vmatpush1.bf16.msra.mxu0 0
    %446 = vmatprep.subr.bf16.mxu0 0
    %447 = vmatpush1.bf16.msra.mxu0 0
    %448 = vmatprep.subr.bf16.mxu0 0
    %449 = vmatpush1.bf16.msra.mxu0 0
    %450 = vmatprep.subr.bf16.mxu0 0
    %451 = vmatpush1.bf16.msra.mxu0 0
    %452 = vmatprep.subr.bf16.mxu0 0
    %453 = vmatpush1.bf16.msra.mxu0 0
    %454 = vmatprep.subr.bf16.mxu0 0
    %455 = vmatpush1.bf16.msra.mxu0 0
    %456 = vmatprep.subr.bf16.mxu0 0
    %457 = vmatpush1.bf16.msra.mxu0 0
    %458 = vmatprep.subr.bf16.mxu0 0
    %459 = vmatpush1.bf16.msra.mxu0 0
    %460 = vmatprep.mubr.bf16.mxu0 0
    %461 = vmatmul.mubr.bf16.gmra.mrb[0].mxu0 %v426
    %v462 = vpop.f32.mrb[0].mxu0
    %v463 = vadd.f32 0.0, %v462
    %v464 = vpop.f32.mrb[0].mxu0
    %v465 = vpop.f32.mrb[0].mxu0
    %v466 = vadd.f32 0.0, %v465
    %v467 = vpop.f32.mrb[0].mxu0
    %468 = vdwg.mxu0
    %v469 = vmul.f32 %v463, %v415
    %v470 = vmul.f32 %v466, %v416
    %vm471 = vcmp.gt.f32.partialorder %v469, 0.0
    %vm472 = vcmp.gt.f32.partialorder %v470, 0.0
    %v473 = vmin.f32 %v469, 0.0
    %v474 = vmin.f32 %v470, 0.0
    %v475 = vmul.f32 %v473, 1.442695
    %v476 = vpow.pop %v475
    %v477 = vmul.f32 %v474, 1.442695
    %v478 = vpow.pop %v477
    %v479 = vsub.f32 %v476, 1.0
    %v480 = vsub.f32 %v478, 1.0
    %v481 = vsel %vm471, %v469, %v479
    %v482 = vsel %vm472, %v470, %v480
    %v483 = vpack.c.bf16 %v382, %v380
    %485 = vrot.lane.b32.xlu0 %v424, 120
    %v486 = vpop.permute.xlu0 %485
    %v489 = vsel %vm342, %v483, 0
    %491 = vmatprep.subr.bf16.mxu0 0
    %492 = vmatpush1.bf16.msra.mxu0 %v486
    %493 = vmatprep.subr.bf16.mxu0 0
    %494 = vmatpush1.bf16.msra.mxu0 0
    %495 = vmatprep.subr.bf16.mxu0 0
    %496 = vmatpush1.bf16.msra.mxu0 0
    %497 = vmatprep.subr.bf16.mxu0 0
    %498 = vmatpush1.bf16.msra.mxu0 0
    %499 = vmatprep.subr.bf16.mxu0 0
    %500 = vmatpush1.bf16.msra.mxu0 0
    %501 = vmatprep.subr.bf16.mxu0 0
    %502 = vmatpush1.bf16.msra.mxu0 0
    %503 = vmatprep.subr.bf16.mxu0 0
    %504 = vmatpush1.bf16.msra.mxu0 0
    %505 = vmatprep.subr.bf16.mxu0 0
    %506 = vmatpush1.bf16.msra.mxu0 0
    %507 = vmatprep.subr.bf16.mxu0 0
    %508 = vmatpush1.bf16.msra.mxu0 0
    %509 = vmatprep.subr.bf16.mxu0 0
    %510 = vmatpush1.bf16.msra.mxu0 0
    %511 = vmatprep.subr.bf16.mxu0 0
    %512 = vmatpush1.bf16.msra.mxu0 0
    %513 = vmatprep.subr.bf16.mxu0 0
    %514 = vmatpush1.bf16.msra.mxu0 0
    %515 = vmatprep.subr.bf16.mxu0 0
    %516 = vmatpush1.bf16.msra.mxu0 0
    %517 = vmatprep.subr.bf16.mxu0 0
    %518 = vmatpush1.bf16.msra.mxu0 0
    %519 = vmatprep.subr.bf16.mxu0 0
    %520 = vmatpush1.bf16.msra.mxu0 0
    %521 = vmatprep.subr.bf16.mxu0 0
    %522 = vmatpush1.bf16.msra.mxu0 0
    %523 = vmatprep.mubr.bf16.mxu0 0
    %524 = vmatmul.mubr.bf16.gmra.mrb[0].mxu0 %v489
    %v525 = vpop.f32.mrb[0].mxu0
    %v526 = vadd.f32 0.0, %v525
    %v527 = vpop.f32.mrb[0].mxu0
    %v528 = vpop.f32.mrb[0].mxu0
    %v529 = vadd.f32 0.0, %v528
    %v530 = vpop.f32.mrb[0].mxu0
    %531 = vdwg.mxu0
    %v532 = vmul.f32 %v526, %v417
    %v533 = vmul.f32 %v529, %v418
    %vm534 = vcmp.gt.f32.partialorder %v532, 0.0
    %vm535 = vcmp.gt.f32.partialorder %v533, 0.0
    %v536 = vmin.f32 %v532, 0.0
    %v537 = vmin.f32 %v533, 0.0
    %v538 = vmul.f32 %v536, 1.442695
    %v539 = vpow.pop %v538
    %v540 = vmul.f32 %v537, 1.442695
    %v541 = vpow.pop %v540
    %v542 = vsub.f32 %v539, 1.0
    %v543 = vsub.f32 %v541, 1.0
    %v544 = vsel %vm534, %v532, %v542
    %v545 = vsel %vm535, %v533, %v543
    %v546 = vpack.c.bf16 %v386, %v384
    %547 = vrot.lane.b32.xlu0 %v424, 112
    %v548 = vpop.permute.xlu0 %547
    %v551 = vsel %vm342, %v546, 0
    %553 = vmatprep.subr.bf16.mxu0 0
    %554 = vmatpush1.bf16.msra.mxu0 %v548
    %555 = vmatprep.subr.bf16.mxu0 0
    %556 = vmatpush1.bf16.msra.mxu0 0
    %557 = vmatprep.subr.bf16.mxu0 0
    %558 = vmatpush1.bf16.msra.mxu0 0
    %559 = vmatprep.subr.bf16.mxu0 0
    %560 = vmatpush1.bf16.msra.mxu0 0
    %561 = vmatprep.subr.bf16.mxu0 0
    %562 = vmatpush1.bf16.msra.mxu0 0
    %563 = vmatprep.subr.bf16.mxu0 0
    %564 = vmatpush1.bf16.msra.mxu0 0
    %565 = vmatprep.subr.bf16.mxu0 0
    %566 = vmatpush1.bf16.msra.mxu0 0
    %567 = vmatprep.subr.bf16.mxu0 0
    %568 = vmatpush1.bf16.msra.mxu0 0
    %569 = vmatprep.subr.bf16.mxu0 0
    %570 = vmatpush1.bf16.msra.mxu0 0
    %571 = vmatprep.subr.bf16.mxu0 0
    %572 = vmatpush1.bf16.msra.mxu0 0
    %573 = vmatprep.subr.bf16.mxu0 0
    %574 = vmatpush1.bf16.msra.mxu0 0
    %575 = vmatprep.subr.bf16.mxu0 0
    %576 = vmatpush1.bf16.msra.mxu0 0
    %577 = vmatprep.subr.bf16.mxu0 0
    %578 = vmatpush1.bf16.msra.mxu0 0
    %579 = vmatprep.subr.bf16.mxu0 0
    %580 = vmatpush1.bf16.msra.mxu0 0
    %581 = vmatprep.subr.bf16.mxu0 0
    %582 = vmatpush1.bf16.msra.mxu0 0
    %583 = vmatprep.subr.bf16.mxu0 0
    %584 = vmatpush1.bf16.msra.mxu0 0
    %585 = vmatprep.mubr.bf16.mxu0 0
    %586 = vmatmul.mubr.bf16.gmra.mrb[0].mxu0 %v551
    %v587 = vpop.f32.mrb[0].mxu0
    %v588 = vadd.f32 0.0, %v587
    %v589 = vpop.f32.mrb[0].mxu0
    %v590 = vpop.f32.mrb[0].mxu0
    %v591 = vadd.f32 0.0, %v590
    %v592 = vpop.f32.mrb[0].mxu0
    %593 = vdwg.mxu0
    %v594 = vmul.f32 %v588, %v419
    %v595 = vmul.f32 %v591, %v420
    %vm596 = vcmp.gt.f32.partialorder %v594, 0.0
    %vm597 = vcmp.gt.f32.partialorder %v595, 0.0
    %v598 = vmin.f32 %v594, 0.0
    %v599 = vmin.f32 %v595, 0.0
    %v600 = vmul.f32 %v598, 1.442695
    %v601 = vpow.pop %v600
    %v602 = vmul.f32 %v599, 1.442695
    %v603 = vpow.pop %v602
    %v604 = vsub.f32 %v601, 1.0
    %v605 = vsub.f32 %v603, 1.0
    %v606 = vsel %vm596, %v594, %v604
    %v607 = vsel %vm597, %v595, %v605
    %v608 = vpack.c.bf16 %v390, %v388
    %609 = vrot.lane.b32.xlu0 %v424, 104
    %v610 = vpop.permute.xlu0 %609
    %v613 = vsel %vm342, %v608, 0
    %615 = vmatprep.subr.bf16.mxu0 0
    %616 = vmatpush1.bf16.msra.mxu0 %v610
    %617 = vmatprep.subr.bf16.mxu0 0
    %618 = vmatpush1.bf16.msra.mxu0 0
    %619 = vmatprep.subr.bf16.mxu0 0
    %620 = vmatpush1.bf16.msra.mxu0 0
    %621 = vmatprep.subr.bf16.mxu0 0
    %622 = vmatpush1.bf16.msra.mxu0 0
    %623 = vmatprep.subr.bf16.mxu0 0
    %624 = vmatpush1.bf16.msra.mxu0 0
    %625 = vmatprep.subr.bf16.mxu0 0
    %626 = vmatpush1.bf16.msra.mxu0 0
    %627 = vmatprep.subr.bf16.mxu0 0
    %628 = vmatpush1.bf16.msra.mxu0 0
    %629 = vmatprep.subr.bf16.mxu0 0
    %630 = vmatpush1.bf16.msra.mxu0 0
    %631 = vmatprep.subr.bf16.mxu0 0
    %632 = vmatpush1.bf16.msra.mxu0 0
    %633 = vmatprep.subr.bf16.mxu0 0
    %634 = vmatpush1.bf16.msra.mxu0 0
    %635 = vmatprep.subr.bf16.mxu0 0
    %636 = vmatpush1.bf16.msra.mxu0 0
    %637 = vmatprep.subr.bf16.mxu0 0
    %638 = vmatpush1.bf16.msra.mxu0 0
    %639 = vmatprep.subr.bf16.mxu0 0
    %640 = vmatpush1.bf16.msra.mxu0 0
    %641 = vmatprep.subr.bf16.mxu0 0
    %642 = vmatpush1.bf16.msra.mxu0 0
    %643 = vmatprep.subr.bf16.mxu0 0
    %644 = vmatpush1.bf16.msra.mxu0 0
    %645 = vmatprep.subr.bf16.mxu0 0
    %646 = vmatpush1.bf16.msra.mxu0 0
    %647 = vmatprep.mubr.bf16.mxu0 0
    %648 = vmatmul.mubr.bf16.gmra.mrb[0].mxu0 %v613
    %v649 = vpop.f32.mrb[0].mxu0
    %v650 = vadd.f32 0.0, %v649
    %v651 = vpop.f32.mrb[0].mxu0
    %v652 = vpop.f32.mrb[0].mxu0
    %v653 = vadd.f32 0.0, %v652
    %v654 = vpop.f32.mrb[0].mxu0
    %655 = vdwg.mxu0
    %v656 = vmul.f32 %v650, %v421
    %v657 = vmul.f32 %v653, %v422
    %vm658 = vcmp.gt.f32.partialorder %v656, 0.0
    %vm659 = vcmp.gt.f32.partialorder %v657, 0.0
    %v660 = vmin.f32 %v656, 0.0
    %v661 = vmin.f32 %v657, 0.0
    %v662 = vmul.f32 %v660, 1.442695
    %v663 = vpow.pop %v662
    %v664 = vmul.f32 %v661, 1.442695
    %v665 = vpow.pop %v664
    %v666 = vsub.f32 %v663, 1.0
    %v667 = vsub.f32 %v665, 1.0
    %v668 = vsel %vm658, %v656, %v666
    %v669 = vsel %vm659, %v657, %v667
    %672 = vrot.lane.b32.xlu0 %v544, 8
    %v673 = vpop.permute.xlu0 %672
    %674 = vrot.lane.b32.xlu0 %v545, 8
    %v675 = vpop.permute.xlu0 %674
    %680 = vrot.lane.b32.xlu0 %v606, 16
    %v681 = vpop.permute.xlu0 %680
    %682 = vrot.lane.b32.xlu0 %v607, 16
    %v683 = vpop.permute.xlu0 %682
    %688 = vrot.lane.b32.xlu0 %v668, 24
    %v689 = vpop.permute.xlu0 %688
    %690 = vrot.lane.b32.xlu0 %v669, 24
    %v691 = vpop.permute.xlu0 %690
    %v694 = vsel %vm35, %v481, %v673
    %v695 = vsel %vm35, %v482, %v675
    %v696 = vsel %vm342, %v694, %v681
    %v697 = vsel %vm342, %v695, %v683
    %vm698 = vcmask 195584
    %v699 = vsel %vm698, %v696, %v689
    %v700 = vsel %vm698, %v697, %v691
    %v701 = vpack.c.bf16 %v700, %v699
    %v702 = vld [vmem:[%s4] sm:$0xf]
    %v703 = vld [vmem:[%s4 + $0x4] sm:$0xf]
    %v704 = vld [vmem:[%s4 + $0x8] sm:$0xf]
    %v705 = vld [vmem:[%s4 + $0xc] sm:$0xf]
    %v710 = vunpack.c.l.b16 %v702
    %v711 = vunpack.c.l.b16 %v703
    %v712 = vunpack.c.l.b16 %v704
    %v713 = vunpack.c.l.b16 %v705
    %v714 = vpack.c.b16 %v711, %v710
    %v715 = vpack.c.b16 %v713, %v712
    %v719 = vsel %vm88, %v701, 0
    %721 = vmatprep.subr.bf16.mxu0 0
    %722 = vmatpush1.bf16.msra.mxu0 %v714
    %723 = vmatprep.subr.bf16.mxu0 0
    %724 = vmatpush1.bf16.msra.mxu0 %v715
    %725 = vmatprep.subr.bf16.mxu0 0
    %726 = vmatpush1.bf16.msra.mxu0 0
    %727 = vmatprep.subr.bf16.mxu0 0
    %728 = vmatpush1.bf16.msra.mxu0 0
    %729 = vmatprep.subr.bf16.mxu0 0
    %730 = vmatpush1.bf16.msra.mxu0 0
    %731 = vmatprep.subr.bf16.mxu0 0
    %732 = vmatpush1.bf16.msra.mxu0 0
    %733 = vmatprep.subr.bf16.mxu0 0
    %734 = vmatpush1.bf16.msra.mxu0 0
    %735 = vmatprep.subr.bf16.mxu0 0
    %736 = vmatpush1.bf16.msra.mxu0 0
    %737 = vmatprep.subr.bf16.mxu0 0
    %738 = vmatpush1.bf16.msra.mxu0 0
    %739 = vmatprep.subr.bf16.mxu0 0
    %740 = vmatpush1.bf16.msra.mxu0 0
    %741 = vmatprep.subr.bf16.mxu0 0
    %742 = vmatpush1.bf16.msra.mxu0 0
    %743 = vmatprep.subr.bf16.mxu0 0
    %744 = vmatpush1.bf16.msra.mxu0 0
    %745 = vmatprep.subr.bf16.mxu0 0
    %746 = vmatpush1.bf16.msra.mxu0 0
    %747 = vmatprep.subr.bf16.mxu0 0
    %748 = vmatpush1.bf16.msra.mxu0 0
    %749 = vmatprep.subr.bf16.mxu0 0
    %750 = vmatpush1.bf16.msra.mxu0 0
    %751 = vmatprep.subr.bf16.mxu0 0
    %752 = vmatpush1.bf16.msra.mxu0 0
    %753 = vmatprep.mubr.bf16.mxu0 0
    %754 = vmatmul.mubr.bf16.gmra.mrb[0].mxu0 %v719
    %v755 = vpop.f32.mrb[0].mxu0
    %v756 = vadd.f32 0.0, %v755
    %v757 = vpop.f32.mrb[0].mxu0
    %v758 = vpop.f32.mrb[0].mxu0
    %v759 = vadd.f32 0.0, %v758
    %v760 = vpop.f32.mrb[0].mxu0
    %761 = vdwg.mxu0
    %v762 = vld [vmem:[%s5] sm:$0x3]
    %v763 = vlaneseq
    %v764 = vshrl.u32 %v763, 7
    %v765 = vsub.s32 0, %v764
    %v766 = vrot.slane %v762, %v765
    %v767 = vmul.f32 %v756, %v766
    %v768 = vmul.f32 %v759, %v766
    %vm769 = vcmask 31744
    %v770 = vsel %vm769, %v767, 0.0
    %771 = vadd.xlane.f32.xlu0 %v770
    %v772 = vpop.xlane.xlu0 %771
    %v773 = vsel %vm769, %v768, 0.0
    %774 = vadd.xlane.f32.xlu0 %v773
    %v775 = vpop.xlane.xlu0 %774
    %v776 = vlaneseq
    %v777 = vshrl.u32 %v776, 7
    %v778 = vsub.s32 1, %v777
    %v779 = vrot.slane %v762, %v778
    %v780 = vmul.f32 %v756, %v779
    %v781 = vmul.f32 %v759, %v779
    %v782 = vsel %vm769, %v780, 0.0
    %783 = vadd.xlane.f32.xlu0 %v782
    %v784 = vpop.xlane.xlu0 %783
    %v785 = vsel %vm769, %v781, 0.0
    %786 = vadd.xlane.f32.xlu0 %v785
    %v787 = vpop.xlane.xlu0 %786
    %788 = vxpose.xlu0.b32.start [1/16] %v784, 128
    %789 = vxpose.xlu0.b32.cont [2/16] %v787, 128
    %790 = vxpose.xlu0.b32.cont [3/16] 0.0, 128
    %791 = vxpose.xlu0.b32.cont [4/16] 0.0, 128
    %792 = vxpose.xlu0.b32.cont [5/16] 0.0, 128
    %793 = vxpose.xlu0.b32.cont [6/16] 0.0, 128
    %794 = vxpose.xlu0.b32.cont [7/16] 0.0, 128
    %795 = vxpose.xlu0.b32.cont [8/16] 0.0, 128
    %796 = vxpose.xlu0.b32.cont [9/16] 0.0, 128
    %797 = vxpose.xlu0.b32.cont [10/16] 0.0, 128
    %798 = vxpose.xlu0.b32.cont [11/16] 0.0, 128
    %799 = vxpose.xlu0.b32.cont [12/16] 0.0, 128
    %800 = vxpose.xlu0.b32.cont [13/16] 0.0, 128
    %801 = vxpose.xlu0.b32.cont [14/16] 0.0, 128
    %802 = vxpose.xlu0.b32.cont [15/16] 0.0, 128
    %803 = vxpose.xlu0.b32.end [16/16] 0.0, 128
    %v804 = vpop.trf.xlu0
    %v805 = vpop.trf.xlu0
    %v806 = vpop.trf.xlu0
    %v807 = vpop.trf.xlu0
    %v808 = vpop.trf.xlu0
    %v809 = vpop.trf.xlu0
    %v810 = vpop.trf.xlu0
    %v811 = vpop.trf.xlu0
    %v812 = vpop.trf.xlu0
    %v813 = vpop.trf.xlu0
    %v814 = vpop.trf.xlu0
    %v815 = vpop.trf.xlu0
    %v816 = vpop.trf.xlu0
    %v817 = vpop.trf.xlu0
    %v818 = vpop.trf.xlu0
    %v819 = vpop.trf.xlu0
    %v820 = vlaneseq
    %v821 = vshrl.u32 %v820, 7
    %v822 = vsub.s32 0, %v821
    %v823 = vrot.slane %v804, %v822
    %v824 = vadd.f32 %v772, %v823
    %v825 = vadd.f32 %v775, %v823
    %vm826 = vcmp.gt.f32.partialorder %v824, 0.0
    %vm827 = vcmp.gt.f32.partialorder %v825, 0.0
    %v828 = vmul.f32 %v824, 0.2
    %v829 = vmul.f32 %v825, 0.2
    %v830 = vsel %vm826, %v824, %v828
    %v831 = vsel %vm827, %v825, %v829
    %v832 = vsel %vm328, %v830, -9e+15
    %v833 = vsel %vm329, %v831, -9e+15
    %v834 = vsel %vm342, %v832, -inf
    %835 = vmax.xlane.f32.xlu0 %v834
    %v836 = vpop.xlane.xlu0 %835
    %v837 = vsel %vm342, %v833, -inf
    %838 = vmax.xlane.f32.xlu0 %v837
    %v839 = vpop.xlane.xlu0 %838
    %v840 = vsub.f32 %v832, %v836
    %v841 = vsub.f32 %v833, %v839
    %v842 = vmul.f32 %v840, 1.442695
    %v843 = vpow.pop %v842
    %v844 = vmul.f32 %v841, 1.442695
    %v845 = vpow.pop %v844
    %v846 = vsel %vm342, %v843, 0.0
    %847 = vadd.xlane.f32.xlu0 %v846
    %v848 = vpop.xlane.xlu0 %847
    %v849 = vsel %vm342, %v845, 0.0
    %850 = vadd.xlane.f32.xlu0 %v849
    %v851 = vpop.xlane.xlu0 %850
    %v852 = vrcp.pop %v848
    %v853 = vrcp.pop %v851
    %v854 = vpack.c.bf16 %v845, %v843
    %v855 = vpack.c.bf16 %v759, %v756
    %v857 = vsel %vm342, %v854, 0
    %859 = vmatprep.subr.bf16.mxu0 0
    %860 = vmatpush1.bf16.msra.mxu0 %v855
    %861 = vmatprep.subr.bf16.mxu0 0
    %862 = vmatpush1.bf16.msra.mxu0 0
    %863 = vmatprep.subr.bf16.mxu0 0
    %864 = vmatpush1.bf16.msra.mxu0 0
    %865 = vmatprep.subr.bf16.mxu0 0
    %866 = vmatpush1.bf16.msra.mxu0 0
    %867 = vmatprep.subr.bf16.mxu0 0
    %868 = vmatpush1.bf16.msra.mxu0 0
    %869 = vmatprep.subr.bf16.mxu0 0
    %870 = vmatpush1.bf16.msra.mxu0 0
    %871 = vmatprep.subr.bf16.mxu0 0
    %872 = vmatpush1.bf16.msra.mxu0 0
    %873 = vmatprep.subr.bf16.mxu0 0
    %874 = vmatpush1.bf16.msra.mxu0 0
    %875 = vmatprep.subr.bf16.mxu0 0
    %876 = vmatpush1.bf16.msra.mxu0 0
    %877 = vmatprep.subr.bf16.mxu0 0
    %878 = vmatpush1.bf16.msra.mxu0 0
    %879 = vmatprep.subr.bf16.mxu0 0
    %880 = vmatpush1.bf16.msra.mxu0 0
    %881 = vmatprep.subr.bf16.mxu0 0
    %882 = vmatpush1.bf16.msra.mxu0 0
    %883 = vmatprep.subr.bf16.mxu0 0
    %884 = vmatpush1.bf16.msra.mxu0 0
    %885 = vmatprep.subr.bf16.mxu0 0
    %886 = vmatpush1.bf16.msra.mxu0 0
    %887 = vmatprep.subr.bf16.mxu0 0
    %888 = vmatpush1.bf16.msra.mxu0 0
    %889 = vmatprep.subr.bf16.mxu0 0
    %890 = vmatpush1.bf16.msra.mxu0 0
    %891 = vmatprep.mubr.bf16.mxu0 0
    %892 = vmatmul.mubr.bf16.gmra.mrb[0].mxu0 %v857
    %v893 = vpop.f32.mrb[0].mxu0
    %v894 = vadd.f32 0.0, %v893
    %v895 = vpop.f32.mrb[0].mxu0
    %v896 = vpop.f32.mrb[0].mxu0
    %v897 = vadd.f32 0.0, %v896
    %v898 = vpop.f32.mrb[0].mxu0
    %899 = vdwg.mxu0
    %v900 = vmul.f32 %v894, %v852
    %v901 = vmul.f32 %v897, %v853
    %vm902 = vcmp.gt.f32.partialorder %v900, 0.0
    %vm903 = vcmp.gt.f32.partialorder %v901, 0.0
    %v904 = vmin.f32 %v900, 0.0
    %v905 = vmin.f32 %v901, 0.0
    %v906 = vmul.f32 %v904, 1.442695
    %v907 = vpow.pop %v906
    %v908 = vmul.f32 %v905, 1.442695
    %v909 = vpow.pop %v908
    %v910 = vsub.f32 %v907, 1.0
    %v911 = vsub.f32 %v909, 1.0
    %v912 = vsel %vm902, %v900, %v910
    %v913 = vsel %vm903, %v901, %v911
    %v914 = vsel %vm769, %v912, -inf
    %915 = vmax.xlane.f32.xlu0 %v914
    %v916 = vpop.xlane.xlu0 %915
    %v917 = vsel %vm769, %v913, -inf
    %918 = vmax.xlane.f32.xlu0 %v917
    %v919 = vpop.xlane.xlu0 %918
    %v920 = vsub.f32 %v912, %v916
    %v921 = vsub.f32 %v913, %v919
    %v922 = vmul.f32 %v920, 1.442695
    %v923 = vpow.pop %v922
    %v924 = vmul.f32 %v921, 1.442695
    %v925 = vpow.pop %v924
    %v926 = vsel %vm769, %v923, 0.0
    %927 = vadd.xlane.f32.xlu0 %v926
    %v928 = vpop.xlane.xlu0 %927
    %v929 = vsel %vm769, %v925, 0.0
    %930 = vadd.xlane.f32.xlu0 %v929
    %v931 = vpop.xlane.xlu0 %930
    %v932 = vlog2.pop %v928
    %v933 = vmul.f32 %v932, 0.6931472
    %v934 = vlog2.pop %v931
    %v935 = vmul.f32 %v934, 0.6931472
    %v936 = vadd.f32 %v916, %v933
    %v937 = vadd.f32 %v919, %v935
    %v938 = vsub.f32 %v912, %v936
    %v939 = vsub.f32 %v913, %v937
    %v940 = vsel %vm769, %v938, 0.0
    %v941 = vsel %vm769, %v939, 0.0
    %942 = vst [vmem:[#allocation2] sm:$0xff] %v940
    %943 = vst [vmem:[#allocation2 + $0x8] sm:$0xff] %v941
    // Predicated region
    $region26: #{tpu_custom_call.1} parent=1 // pred_check
      _
    $region27: #{tpu_custom_call.1} parent=1 // pred_check_branch
      %945 = sbr.rel (0) target = $region29
    $region28: #{tpu_custom_call.1} parent=1 // pred_region
      %s947 = ssub.s32 256, 256
      %948 = vsyncadd [#allocation3], %s947
      %s949 = sshll.u32 [#allocation2], 4
      %s950 = int_to_ptr.vmem [resolvable:$true] %s949
      %955 = dma.vmem_to_hbm [thread:$0]  %s950, 256, %s6, [#allocation3], 128, 128, 8
    $region29: #{tpu_custom_call.1} parent=1 // pred_fallthru
      _
    // Predicated region
    $region30: #{tpu_custom_call.1} parent=1 // pred_check
      _
    $region31: #{tpu_custom_call.1} parent=1 // pred_check_branch
      %957 = sbr.rel (0) target = $region33
    $region32: #{tpu_custom_call.1} parent=1 // pred_region
      %958 = dma.done [#allocation3], 256
    $region33: #{tpu_custom_call.1} parent=1 // pred_fallthru
      _
    %959 = vsyncpa [#allocation3], 1

</llo_original>
